<compile_context>
chip_gen: v7x
topology: tpu7x:2x2x1
jax: 0.10.0
libtpu: 0.0.40
codegen_flags: <defaults>
</compile_context>

<pallas_src>
import functools

import jax
import jax.numpy as jnp
from jax.experimental import pallas as pl
from jax.experimental.pallas import tpu as pltpu


def _vmem_capacity_bytes():
    """Physical VMEM of the current TPU generation (conservative fallback)."""
    try:
        return int(pltpu.get_tpu_info().vmem_capacity_bytes)
    except Exception:
        return 64 * 1024 * 1024  # v7x-sized, conservative


def _pick_q_tile(S, H, heads, act_itemsize, vmem_budget):
    """Largest q-row tile dividing S whose live-VMEM estimate fits the budget."""
    dh = H // heads
    dh_pad = max(dh, 128)  # lane padding of the per-head K/V caches
    fixed = (2 * heads * S * dh_pad * act_itemsize   # K/V caches
             + 2 * S * H * act_itemsize              # double-buffered (1,S,H) block
             + 2 * 4 * H * H * act_itemsize)         # resident weights (x2 buffers)
    divisors = [t for t in (512, 256, 128, 64, 32, 16, 8) if S % t == 0]
    if not divisors:
        return S
    for t in divisors:
        live = (fixed
                + 3 * t * S * 4                      # f32 score/exp/prob temporaries
                + 2 * 2 * t * H * act_itemsize       # q-tile in + out blocks (x2 bufs)
                + t * H * 4)                         # f32 output accumulator
        if live <= vmem_budget:
            return t
    return divisors[-1]                              # smallest divisor: best effort


def _lora_attn_kernel(compute_dtype, approx_recip,
                      hsq_ref, hskv_ref, wq_ref, wk_ref, wv_ref, wo_ref, bo_ref,
                      o_ref, kc_ref, vc_ref, acc_ref):
    # Grid: (batch, q_tile, head); batch is the only "parallel" axis.
    i = pl.program_id(1)   # q-row tile within the sequence
    h = pl.program_id(2)   # head (innermost, sequential reduction axis)

    # K/V projection cache: depends only on (batch, head).  Compute it at the
    # first q-tile of each batch (one head slice per head step) and reuse it
    # for every later q-tile of that batch.
    @pl.when(i == 0)
    def _():
        xkv = hskv_ref[0]                                             # (S, H)
        kc_ref[h] = jnp.dot(xkv, wk_ref[h],
                            preferred_element_type=compute_dtype)     # (S, dh)
        vc_ref[h] = jnp.dot(xkv, wv_ref[h],
                            preferred_element_type=compute_dtype)     # (S, dh)

    xq = hsq_ref[0]                                                   # (TQ, H)
    q = jnp.dot(xq, wq_ref[h],
                preferred_element_type=compute_dtype)                 # (TQ, dh), scale folded
    k = kc_ref[h]                                                     # (S, dh)
    v = vc_ref[h]                                                     # (S, dh)

    # scores = q @ k^T (f32 accumulation) without materializing a transpose.
    scores = jax.lax.dot_general(q, k, (((1,), (1,)), ((), ())),
                                 preferred_element_type=jnp.float32)  # (TQ, S)

    # Numerically-stable softmax over keys (f32).
    scores = scores - jnp.max(scores, axis=-1, keepdims=True)
    e = jnp.exp(scores)
    denom = jnp.sum(e, axis=-1, keepdims=True)
    if approx_recip:
        probs = e * pl.reciprocal(denom, approx=True)   # EUP reciprocal + VPU mul
    else:
        probs = e / denom                               # exact path for f32 check

    ctx = jnp.dot(probs.astype(compute_dtype), v,
                  preferred_element_type=jnp.float32)                 # (TQ, dh)

    # This head's contribution to to_out[0]:  ctx_h @ Wo[h*dh:(h+1)*dh, :].
    partial = jnp.dot(ctx.astype(compute_dtype), wo_ref[h],
                      preferred_element_type=jnp.float32)             # (TQ, H)

    @pl.when(h == 0)
    def _():
        acc_ref[...] = partial + bo_ref[...]            # bias added once

    @pl.when(h != 0)
    def _():
        acc_ref[...] = acc_ref[...] + partial

    @pl.when(h == pl.num_programs(2) - 1)
    def _():
        o_ref[0] = acc_ref[...].astype(o_ref.dtype)     # lane-dense full-tile store


def lora_attn_processor(hidden_states, params, heads, *, compute_dtype=jnp.bfloat16):
    B, S, H = hidden_states.shape
    assert H % heads == 0, "hidden size must be divisible by heads"
    dh = H // heads
    scale = float(dh) ** -0.5
    f32 = jnp.float32

    # ---- wrapper-side weight preparation (runs once per call, in XLA) ----
    wq_t = params["wq"].T.astype(f32) * scale            # scale folded into Wq
    wk_t = params["wk"].T.astype(f32)
    wv_t = params["wv"].T.astype(f32)
    wlk_t, wlkp_t = params["wlk"].T.astype(f32), params["wlkp"].T.astype(f32)
    wlv_t, wlvp_t = params["wlv"].T.astype(f32), params["wlvp"].T.astype(f32)

    # LoRA fold without materializing eye(H): rank-r GEMMs only.
    wk_fused_t = wk_t + (wk_t @ wlk_t) @ wlkp_t
    wv_fused_t = wv_t + (wv_t @ wlv_t) @ wlvp_t

    # Heads-major per-head weight slices (fold done in f32, then cast).
    wq3 = wq_t.reshape(H, heads, dh).transpose(1, 0, 2).astype(compute_dtype)        # (h, H, dh)
    wk3 = wk_fused_t.reshape(H, heads, dh).transpose(1, 0, 2).astype(compute_dtype)  # (h, H, dh)
    wv3 = wv_fused_t.reshape(H, heads, dh).transpose(1, 0, 2).astype(compute_dtype)  # (h, H, dh)
    wo3 = params["wo"].T.astype(compute_dtype).reshape(heads, dh, H)                 # (h, dh, H)
    bo = params["bo"].astype(f32).reshape(1, H)

    # Cast activations once in the wrapper (halves HBM traffic in bf16 path).
    hs_c = hidden_states.astype(compute_dtype)

    act_itemsize = jnp.dtype(compute_dtype).itemsize
    vmem_cap = _vmem_capacity_bytes()
    # ~32 MiB on v7x (64 MiB physical), 64 MiB on v5e/v6e (128 MiB physical).
    vmem_limit = min(64 * 1024 * 1024, max(32 * 1024 * 1024, vmem_cap // 2))
    TQ = _pick_q_tile(S, H, heads, act_itemsize, int(vmem_limit * 0.8))
    n_q = S // TQ
    approx = jnp.dtype(compute_dtype) != jnp.dtype(jnp.float32)

    kernel = functools.partial(_lora_attn_kernel, compute_dtype, approx)

    return pl.pallas_call(
        kernel,
        out_shape=jax.ShapeDtypeStruct((B, S, H), hidden_states.dtype),
        grid=(B, n_q, heads),
        in_specs=[
            pl.BlockSpec((1, TQ, H), lambda b, i, h: (b, i, 0)),       # query rows tile
            pl.BlockSpec((1, S, H), lambda b, i, h: (b, 0, 0)),        # full seq for K/V
            pl.BlockSpec((heads, H, dh), lambda b, i, h: (0, 0, 0)),   # Wq (scaled), resident
            pl.BlockSpec((heads, H, dh), lambda b, i, h: (0, 0, 0)),   # Wk fused, resident
            pl.BlockSpec((heads, H, dh), lambda b, i, h: (0, 0, 0)),   # Wv fused, resident
            pl.BlockSpec((heads, dh, H), lambda b, i, h: (0, 0, 0)),   # Wo rows, resident
            pl.BlockSpec((1, H), lambda b, i, h: (0, 0)),              # to_out bias
        ],
        out_specs=pl.BlockSpec((1, TQ, H), lambda b, i, h: (b, i, 0)),
        scratch_shapes=[
            pltpu.VMEM((heads, S, dh), compute_dtype),   # K projection cache (per batch)
            pltpu.VMEM((heads, S, dh), compute_dtype),   # V projection cache (per batch)
            pltpu.VMEM((TQ, H), jnp.float32),            # output-proj accumulator
        ],
        compiler_params=pltpu.CompilerParams(
            dimension_semantics=("parallel", "arbitrary", "arbitrary"),
            vmem_limit_bytes=int(vmem_limit)),
    )(hs_c, hs_c, wq3, wk3, wv3, wo3, bo)


def reference(hs, params, heads):
    """Pure-JAX reference mirroring the PyTorch forward."""
    B, S, H = hs.shape
    dh = H // heads
    scale = float(dh) ** -0.5
    q = hs @ params["wq"].T
    k = hs @ params["wk"].T
    v = hs @ params["wv"].T
    k = k + (k @ params["wlk"].T) @ params["wlkp"].T
    v = v + (v @ params["wlv"].T) @ params["wlvp"].T

    def h2b(x):
        return x.reshape(B, S, heads, dh).transpose(0, 2, 1, 3).reshape(B * heads, S, dh)

    q, k, v = h2b(q), h2b(k), h2b(v)
    scores = jnp.einsum("bsd,btd->bst", q, k) * scale
    probs = jax.nn.softmax(scores, axis=-1)
    ctx = jnp.einsum("bst,btd->bsd", probs, v)
    ctx = ctx.reshape(B, heads, S, dh).transpose(0, 2, 1, 3).reshape(B, S, H)
    return ctx @ params["wo"].T + params["bo"]


if __name__ == "__main__":
    # small, module-consistent shapes
    B, S, H = 2, 8, 32          # batch, sequence, hidden_size
    heads = 4                   # attn.heads
    rank = 4                    # LoRA rank

    key = jax.random.PRNGKey(0)
    ks = jax.random.split(key, 10)
    init = lambda k, shape: jax.random.normal(k, shape, jnp.float32) * 0.05

    params = {
        "wq": init(ks[0], (H, H)),        # attn.to_q.weight   (out, in), no bias
        "wk": init(ks[1], (H, H)),        # attn.to_k.weight
        "wv": init(ks[2], (H, H)),        # attn.to_v.weight
        "wlk": init(ks[3], (rank, H)),    # lora_k.weight
        "wlkp": init(ks[4], (H, rank)),   # lora_k_proj.weight
        "wlv": init(ks[5], (rank, H)),    # lora_v.weight
        "wlvp": init(ks[6], (H, rank)),   # lora_v_proj.weight
        "wo": init(ks[7], (H, H)),        # attn.to_out[0].weight
        "bo": init(ks[8], (H,)),          # attn.to_out[0].bias
    }
    hidden_states = jax.random.normal(ks[9], (B, S, H), jnp.float32)

    ref = reference(hidden_states, params, heads)

    # Exactness check: f32 compute path matches the unfused reference closely.
    out_f32 = jax.block_until_ready(
        lora_attn_processor(hidden_states, params, heads, compute_dtype=jnp.float32))
    assert out_f32.shape == (B, S, H)
    assert jnp.allclose(out_f32, ref, rtol=1e-4, atol=1e-4), "f32 path mismatch vs reference"

    # Fast path: bf16 matmuls with f32 accumulation (default compute dtype).
    out_bf16 = jax.block_until_ready(lora_attn_processor(hidden_states, params, heads))
    assert out_bf16.shape == (B, S, H)
    assert jnp.allclose(out_bf16, ref, rtol=3e-2, atol=3e-2), "bf16 path mismatch vs reference"

    print("KERNEL_OK")
</pallas_src>

<mosaic_0001>
module attributes {stable_mosaic.version = 11 : i64} {
  func.func @_lora_attn_kernel(%arg0: i32, %arg1: i32, %arg2: i32, %arg3: memref<1x8x32xf32, #tpu.memory_space<vmem>>, %arg4: memref<1x8x32xf32, #tpu.memory_space<vmem>>, %arg5: memref<4x32x8xf32, #tpu.memory_space<vmem>>, %arg6: memref<4x32x8xf32, #tpu.memory_space<vmem>>, %arg7: memref<4x32x8xf32, #tpu.memory_space<vmem>>, %arg8: memref<4x8x32xf32, #tpu.memory_space<vmem>>, %arg9: memref<1x32xf32, #tpu.memory_space<vmem>>, %arg10: memref<1x8x32xf32, #tpu.memory_space<vmem>>, %arg11: memref<4x8x8xf32, #tpu.memory_space<vmem>>, %arg12: memref<4x8x8xf32, #tpu.memory_space<vmem>>, %arg13: memref<8x32xf32, #tpu.memory_space<vmem>>) attributes {dimension_semantics = [#tpu.dimension_semantics<parallel>, #tpu.dimension_semantics<arbitrary>, #tpu.dimension_semantics<arbitrary>], iteration_bounds = array<i64: 2, 1, 4>, scalar_prefetch = 0 : i64, scratch_operands = 3 : i64, tpu.core_type = #tpu.core_type<tc>, window_params = [{transform_indices = @transform_0, window_bounds = array<i64: 1, 8, 32>}, {transform_indices = @transform_1, window_bounds = array<i64: 1, 8, 32>}, {pipeline_mode = #tpu.pipeline_mode<synchronous>, transform_indices = @transform_2, window_bounds = array<i64: 4, 32, 8>}, {pipeline_mode = #tpu.pipeline_mode<synchronous>, transform_indices = @transform_3, window_bounds = array<i64: 4, 32, 8>}, {pipeline_mode = #tpu.pipeline_mode<synchronous>, transform_indices = @transform_4, window_bounds = array<i64: 4, 32, 8>}, {pipeline_mode = #tpu.pipeline_mode<synchronous>, transform_indices = @transform_5, window_bounds = array<i64: 4, 8, 32>}, {pipeline_mode = #tpu.pipeline_mode<synchronous>, transform_indices = @transform_6, window_bounds = array<i64: 1, 32>}, {transform_indices = @transform_7, window_bounds = array<i64: 1, 8, 32>}]} {
    %c0_i32 = arith.constant 0 : i32
    %0 = arith.cmpi eq, %arg1, %c0_i32 : i32
    %1 = arith.extui %0 : i1 to i32
    %c0_i32_0 = arith.constant 0 : i32
    %2 = arith.cmpi ne, %1, %c0_i32_0 : i32
    scf.if %2 {
      %c0_21 = arith.constant 0 : index
      %c0_22 = arith.constant 0 : index
      %c0_23 = arith.constant 0 : index
      %39 = vector.load %arg4[%c0_21, %c0_22, %c0_23] : memref<1x8x32xf32, #tpu.memory_space<vmem>>, vector<1x8x32xf32>
      %40 = vector.shape_cast %39 : vector<1x8x32xf32> to vector<8x32xf32>
      %41 = arith.index_cast %arg2 : i32 to index
      %c0_24 = arith.constant 0 : index
      %c0_25 = arith.constant 0 : index
      %42 = vector.load %arg6[%41, %c0_24, %c0_25] : memref<4x32x8xf32, #tpu.memory_space<vmem>>, vector<1x32x8xf32>
      %43 = vector.shape_cast %42 : vector<1x32x8xf32> to vector<32x8xf32>
      %cst_26 = arith.constant dense<0.000000e+00> : vector<8x8xf32>
      %44 = tpu.matmul %40, %43, %cst_26 {dimension_numbers = #tpu.dot_dimension_numbers<[1], [0], [0], [1], [0, 0, 1, 1], [], []>} : vector<8x32xf32>, vector<32x8xf32>, vector<8x8xf32> -> vector<8x8xf32>
      %45 = arith.index_cast %arg2 : i32 to index
      %c0_27 = arith.constant 0 : index
      %c0_28 = arith.constant 0 : index
      %46 = vector.load %arg11[%45, %c0_27, %c0_28] : memref<4x8x8xf32, #tpu.memory_space<vmem>>, vector<1x8x8xf32>
      %47 = vector.shape_cast %46 : vector<1x8x8xf32> to vector<8x8xf32>
      %48 = vector.shape_cast %44 : vector<8x8xf32> to vector<1x8x8xf32>
      tpu.vector_store %arg11[%45, %c0_27, %c0_28], %48 {strides = array<i32>} : memref<4x8x8xf32, #tpu.memory_space<vmem>>, vector<1x8x8xf32>,
      %49 = arith.index_cast %arg2 : i32 to index
      %c0_29 = arith.constant 0 : index
      %c0_30 = arith.constant 0 : index
      %50 = vector.load %arg7[%49, %c0_29, %c0_30] : memref<4x32x8xf32, #tpu.memory_space<vmem>>, vector<1x32x8xf32>
      %51 = vector.shape_cast %50 : vector<1x32x8xf32> to vector<32x8xf32>
      %cst_31 = arith.constant dense<0.000000e+00> : vector<8x8xf32>
      %52 = tpu.matmul %40, %51, %cst_31 {dimension_numbers = #tpu.dot_dimension_numbers<[1], [0], [0], [1], [0, 0, 1, 1], [], []>} : vector<8x32xf32>, vector<32x8xf32>, vector<8x8xf32> -> vector<8x8xf32>
      %53 = arith.index_cast %arg2 : i32 to index
      %c0_32 = arith.constant 0 : index
      %c0_33 = arith.constant 0 : index
      %54 = vector.load %arg12[%53, %c0_32, %c0_33] : memref<4x8x8xf32, #tpu.memory_space<vmem>>, vector<1x8x8xf32>
      %55 = vector.shape_cast %54 : vector<1x8x8xf32> to vector<8x8xf32>
      %56 = vector.shape_cast %52 : vector<8x8xf32> to vector<1x8x8xf32>
      tpu.vector_store %arg12[%53, %c0_32, %c0_33], %56 {strides = array<i32>} : memref<4x8x8xf32, #tpu.memory_space<vmem>>, vector<1x8x8xf32>,
    } else {
    }
    %c0 = arith.constant 0 : index
    %c0_1 = arith.constant 0 : index
    %c0_2 = arith.constant 0 : index
    %3 = vector.load %arg3[%c0, %c0_1, %c0_2] : memref<1x8x32xf32, #tpu.memory_space<vmem>>, vector<1x8x32xf32>
    %4 = vector.shape_cast %3 : vector<1x8x32xf32> to vector<8x32xf32>
    %5 = arith.index_cast %arg2 : i32 to index
    %c0_3 = arith.constant 0 : index
    %c0_4 = arith.constant 0 : index
    %6 = vector.load %arg5[%5, %c0_3, %c0_4] : memref<4x32x8xf32, #tpu.memory_space<vmem>>, vector<1x32x8xf32>
    %7 = vector.shape_cast %6 : vector<1x32x8xf32> to vector<32x8xf32>
    %cst = arith.constant dense<0.000000e+00> : vector<8x8xf32>
    %8 = tpu.matmul %4, %7, %cst {dimension_numbers = #tpu.dot_dimension_numbers<[1], [0], [0], [1], [0, 0, 1, 1], [], []>} : vector<8x32xf32>, vector<32x8xf32>, vector<8x8xf32> -> vector<8x8xf32>
    %9 = arith.index_cast %arg2 : i32 to index
    %c0_5 = arith.constant 0 : index
    %c0_6 = arith.constant 0 : index
    %10 = vector.load %arg11[%9, %c0_5, %c0_6] : memref<4x8x8xf32, #tpu.memory_space<vmem>>, vector<1x8x8xf32>
    %11 = vector.shape_cast %10 : vector<1x8x8xf32> to vector<8x8xf32>
    %12 = arith.index_cast %arg2 : i32 to index
    %c0_7 = arith.constant 0 : index
    %c0_8 = arith.constant 0 : index
    %13 = vector.load %arg12[%12, %c0_7, %c0_8] : memref<4x8x8xf32, #tpu.memory_space<vmem>>, vector<1x8x8xf32>
    %14 = vector.shape_cast %13 : vector<1x8x8xf32> to vector<8x8xf32>
    %cst_9 = arith.constant dense<0.000000e+00> : vector<8x8xf32>
    %15 = tpu.matmul %8, %11, %cst_9 {dimension_numbers = #tpu.dot_dimension_numbers<[1], [1], [0], [0], [0, 0, 1, 0], [], []>} : vector<8x8xf32>, vector<8x8xf32>, vector<8x8xf32> -> vector<8x8xf32>
    %cst_10 = arith.constant dense<0xFF800000> : vector<8xf32>
    %16 = vector.multi_reduction <maximumf>, %15, %cst_10 [1] : vector<8x8xf32> to vector<8xf32>
    %17 = vector.shape_cast %16 : vector<8xf32> to vector<8x1xf32>
    %18 = vector.broadcast %17 : vector<8x1xf32> to vector<8x8xf32>
    %19 = arith.subf %15, %18 : vector<8x8xf32>
    %20 = math.exp %19 : vector<8x8xf32>
    %cst_11 = arith.constant dense<0.000000e+00> : vector<8xf32>
    %21 = vector.multi_reduction <add>, %20, %cst_11 [1] : vector<8x8xf32> to vector<8xf32>
    %22 = vector.shape_cast %21 : vector<8xf32> to vector<8x1xf32>
    %23 = vector.broadcast %22 : vector<8x1xf32> to vector<8x8xf32>
    %24 = arith.divf %20, %23 : vector<8x8xf32>
    %cst_12 = arith.constant dense<0.000000e+00> : vector<8x8xf32>
    %25 = tpu.matmul %24, %14, %cst_12 {dimension_numbers = #tpu.dot_dimension_numbers<[1], [0], [0], [1], [0, 0, 1, 1], [], []>} : vector<8x8xf32>, vector<8x8xf32>, vector<8x8xf32> -> vector<8x8xf32>
    %26 = arith.index_cast %arg2 : i32 to index
    %c0_13 = arith.constant 0 : index
    %c0_14 = arith.constant 0 : index
    %27 = vector.load %arg8[%26, %c0_13, %c0_14] : memref<4x8x32xf32, #tpu.memory_space<vmem>>, vector<1x8x32xf32>
    %28 = vector.shape_cast %27 : vector<1x8x32xf32> to vector<8x32xf32>
    %cst_15 = arith.constant dense<0.000000e+00> : vector<8x32xf32>
    %29 = tpu.matmul %25, %28, %cst_15 {dimension_numbers = #tpu.dot_dimension_numbers<[1], [0], [0], [1], [0, 0, 1, 1], [], []>} : vector<8x8xf32>, vector<8x32xf32>, vector<8x32xf32> -> vector<8x32xf32>
    %c0_i32_16 = arith.constant 0 : i32
    %30 = arith.cmpi eq, %arg2, %c0_i32_16 : i32
    %31 = arith.extui %30 : i1 to i32
    %c0_i32_17 = arith.constant 0 : i32
    %32 = arith.cmpi ne, %31, %c0_i32_17 : i32
    scf.if %32 {
      %c0_21 = arith.constant 0 : index
      %c0_22 = arith.constant 0 : index
      %39 = vector.load %arg9[%c0_21, %c0_22] : memref<1x32xf32, #tpu.memory_space<vmem>>, vector<1x32xf32>
      %40 = vector.broadcast %39 : vector<1x32xf32> to vector<8x32xf32>
      %41 = arith.addf %29, %40 : vector<8x32xf32>
      %c0_23 = arith.constant 0 : index
      %c0_24 = arith.constant 0 : index
      %42 = vector.load %arg13[%c0_23, %c0_24] : memref<8x32xf32, #tpu.memory_space<vmem>>, vector<8x32xf32>
      tpu.vector_store %arg13[%c0_23, %c0_24], %41 {strides = array<i32>} : memref<8x32xf32, #tpu.memory_space<vmem>>, vector<8x32xf32>,
    } else {
    }
    %c0_i32_18 = arith.constant 0 : i32
    %33 = arith.cmpi ne, %arg2, %c0_i32_18 : i32
    %34 = arith.extui %33 : i1 to i32
    %c0_i32_19 = arith.constant 0 : i32
    %35 = arith.cmpi ne, %34, %c0_i32_19 : i32
    scf.if %35 {
      %c0_21 = arith.constant 0 : index
      %c0_22 = arith.constant 0 : index
      %39 = vector.load %arg13[%c0_21, %c0_22] : memref<8x32xf32, #tpu.memory_space<vmem>>, vector<8x32xf32>
      %40 = arith.addf %39, %29 : vector<8x32xf32>
      %c0_23 = arith.constant 0 : index
      %c0_24 = arith.constant 0 : index
      %41 = vector.load %arg13[%c0_23, %c0_24] : memref<8x32xf32, #tpu.memory_space<vmem>>, vector<8x32xf32>
      tpu.vector_store %arg13[%c0_23, %c0_24], %40 {strides = array<i32>} : memref<8x32xf32, #tpu.memory_space<vmem>>, vector<8x32xf32>,
    } else {
    }
    %c3_i32 = arith.constant 3 : i32
    %36 = arith.cmpi eq, %arg2, %c3_i32 : i32
    %37 = arith.extui %36 : i1 to i32
    %c0_i32_20 = arith.constant 0 : i32
    %38 = arith.cmpi ne, %37, %c0_i32_20 : i32
    scf.if %38 {
      %c0_21 = arith.constant 0 : index
      %c0_22 = arith.constant 0 : index
      %39 = vector.load %arg13[%c0_21, %c0_22] : memref<8x32xf32, #tpu.memory_space<vmem>>, vector<8x32xf32>
      %c0_23 = arith.constant 0 : index
      %c0_24 = arith.constant 0 : index
      %c0_25 = arith.constant 0 : index
      %40 = vector.load %arg10[%c0_23, %c0_24, %c0_25] : memref<1x8x32xf32, #tpu.memory_space<vmem>>, vector<1x8x32xf32>
      %41 = vector.shape_cast %40 : vector<1x8x32xf32> to vector<8x32xf32>
      %42 = vector.shape_cast %39 : vector<8x32xf32> to vector<1x8x32xf32>
      tpu.vector_store %arg10[%c0_23, %c0_24, %c0_25], %42 {strides = array<i32>} : memref<1x8x32xf32, #tpu.memory_space<vmem>>, vector<1x8x32xf32>,
    } else {
    }
    return
  }
  func.func @transform_0(%arg0: i32, %arg1: i32, %arg2: i32) -> (i32, i32, i32) {
    %c0_i32 = arith.constant 0 : i32
    %c0_i32_0 = arith.constant 0 : i32
    return %arg0, %arg1, %c0_i32 : i32, i32, i32
  }
  func.func @transform_1(%arg0: i32, %arg1: i32, %arg2: i32) -> (i32, i32, i32) {
    %c0_i32 = arith.constant 0 : i32
    %c0_i32_0 = arith.constant 0 : i32
    %c0_i32_1 = arith.constant 0 : i32
    return %arg0, %c0_i32, %c0_i32_0 : i32, i32, i32
  }
  func.func @transform_2(%arg0: i32, %arg1: i32, %arg2: i32) -> (i32, i32, i32) {
    %c0_i32 = arith.constant 0 : i32
    %c0_i32_0 = arith.constant 0 : i32
    %c0_i32_1 = arith.constant 0 : i32
    %c0_i32_2 = arith.constant 0 : i32
    return %c0_i32, %c0_i32_0, %c0_i32_1 : i32, i32, i32
  }
  func.func @transform_3(%arg0: i32, %arg1: i32, %arg2: i32) -> (i32, i32, i32) {
    %c0_i32 = arith.constant 0 : i32
    %c0_i32_0 = arith.constant 0 : i32
    %c0_i32_1 = arith.constant 0 : i32
    %c0_i32_2 = arith.constant 0 : i32
    return %c0_i32, %c0_i32_0, %c0_i32_1 : i32, i32, i32
  }
  func.func @transform_4(%arg0: i32, %arg1: i32, %arg2: i32) -> (i32, i32, i32) {
    %c0_i32 = arith.constant 0 : i32
    %c0_i32_0 = arith.constant 0 : i32
    %c0_i32_1 = arith.constant 0 : i32
    %c0_i32_2 = arith.constant 0 : i32
    return %c0_i32, %c0_i32_0, %c0_i32_1 : i32, i32, i32
  }
  func.func @transform_5(%arg0: i32, %arg1: i32, %arg2: i32) -> (i32, i32, i32) {
    %c0_i32 = arith.constant 0 : i32
    %c0_i32_0 = arith.constant 0 : i32
    %c0_i32_1 = arith.constant 0 : i32
    %c0_i32_2 = arith.constant 0 : i32
    return %c0_i32, %c0_i32_0, %c0_i32_1 : i32, i32, i32
  }
  func.func @transform_6(%arg0: i32, %arg1: i32, %arg2: i32) -> (i32, i32) {
    %c0_i32 = arith.constant 0 : i32
    %c0_i32_0 = arith.constant 0 : i32
    %c0_i32_1 = arith.constant 0 : i32
    return %c0_i32, %c0_i32_0 : i32, i32
  }
  func.func @transform_7(%arg0: i32, %arg1: i32, %arg2: i32) -> (i32, i32, i32) {
    %c0_i32 = arith.constant 0 : i32
    %c0_i32_0 = arith.constant 0 : i32
    return %arg0, %arg1, %c0_i32 : i32, i32, i32
  }
}

</mosaic_0001>

<llo_original>
// kernel: tpu_custom_call.1
$region0: #{tpu_custom_call.1}
  #allocation0 [shape = 'u32[]', space=smem, size = 0x4, offset = 0x4, fixed_abs, tag = 'smem constant byte address 0x4 - core index']
  #allocation1 [shape = 'u32[144,128]{1,0:T(1,128)}', space=vmem, size = 0x12000, scoped, tag = 'internal scratch']
  #allocation2 [shape = 'f32[4,8,8]{2,1,0:T(8,128)}', space=vmem, size = 0x4000, scoped, tag = 'scratch operand']
  #allocation3 [shape = 'f32[4,8,8]{2,1,0:T(8,128)}', space=vmem, size = 0x4000, scoped, tag = 'scratch operand']
  #allocation4 [shape = 'f32[8,32]{1,0:T(8,128)}', space=vmem, size = 0x1000, scoped, tag = 'scratch operand']
  %s0 = inlined_call_operand.vmem [shape: f32[2,8,32], index: 0, kind: input, shape index: {}]
  %s1 = inlined_call_operand.vmem [shape: f32[2,8,32], index: 1, kind: input, shape index: {}]
  %s2 = inlined_call_operand.vmem [shape: f32[4,32,8], index: 2, kind: input, shape index: {}]
  %s3 = inlined_call_operand.vmem [shape: f32[4,32,8], index: 3, kind: input, shape index: {}]
  %s4 = inlined_call_operand.vmem [shape: f32[4,32,8], index: 4, kind: input, shape index: {}]
  %s5 = inlined_call_operand.vmem [shape: f32[4,8,32], index: 5, kind: input, shape index: {}]
  %s6 = inlined_call_operand.vmem [shape: f32[1,32], index: 6, kind: input, shape index: {}]
  %s7 = inlined_call_operand.hbm [shape: f32[2,8,32], index: 7, kind: output, shape index: {}]
  %s8 = sld [smem:[#allocation0]]
  $region77: #{tpu_custom_call.1} parent=0
    _
  %s10 = ssub.s32 1, %s8
  %s11 = scalar_select 0, %s10, %s8
  $region1: #{tpu_custom_call.1} parent=0
    #allocation5 [shape = 'u8[8192]{0}', space=vmem, size = 0x2000, scoped, tag = 'output window, operand 0']
    #allocation6 [shape = 's32[2]{0}', space=sflag, size = 0x8, scoped, tag = 'scoped memory for tpu_custom_call.1']
    %12 = vsyncpa [#allocation6], 0
    %s13 = scalar_lea.sflag [#allocation6], 1
    %14 = vsyncpa %s13, 0
    loop: start=0, step=1, limit=10
    $region2: #{tpu_custom_call.1} parent=1 // loop_pre_header
      _
    $region3: #{tpu_custom_call.1} parent=1 // loop_header
      %s16 = sphi 0, %s20
      %p17 = scmp.ge.s32.totalorder %s16, 10
      %s23 = sphi 0, %s42
      %s24 = sphi 0, %s38
      %s25 = sphi 0, %s34
      %s26 = sphi 0, %s23
      %s27 = sphi 0, %s24
      %s28 = sphi 0, %s25
      %s29 = sphi 0, %s26
      %s30 = sphi 0, %s27
      %s31 = sphi 0, %s28
      %s47 = sphi 0, %s49
      %s50 = sphi 0, %s47
      %s51 = sphi 0, %s50
      %s67 = sphi 0, %s51
      %s73 = sphi 0, %s75
      %s76 = sphi 0, %s73
      %s77 = sphi 0, %s76
      %s93 = sphi 0, %s77
      %s97 = sphi 0, %s97
      %s99 = sphi 0, %s97
      %s100 = sphi 0, %s99
      %s114 = sphi 0, %s100
      %s118 = sphi 0, %s118
      %s120 = sphi 0, %s118
      %s121 = sphi 0, %s120
      %s135 = sphi 0, %s121
      %s139 = sphi 0, %s139
      %s141 = sphi 0, %s139
      %s142 = sphi 0, %s141
      %s156 = sphi 0, %s142
      %s160 = sphi 0, %s160
      %s162 = sphi 0, %s160
      %s163 = sphi 0, %s162
      %s177 = sphi 0, %s163
      %s181 = sphi 0, %s181
      %s183 = sphi 0, %s181
      %s184 = sphi 0, %s183
      %s198 = sphi 0, %s184
      %s206 = sphi 0, %s208
      %s209 = sphi 0, %s206
      %s210 = sphi 0, %s209
      %s226 = sphi 0, %s210
    $region4: #{tpu_custom_call.1} parent=1 // loop_header_branch
      %19 = sbr.rel (%p17) target = $region8
    $region5: #{tpu_custom_call.1} parent=1 // loop_body
      %s21 = ssub.s32 %s16, 1
      %s22 = ssub.s32 %s16, 2
      %s32 = sadd.s32 1, %s25
      %p33 = scmp.ge.s32.totalorder %s32, 4
      %s34 = scalar_select %p33, 0, %s32
      %s35 = sadd.s32 1, %s24
      %s36 = scalar_select %p33, %s35, %s24
      %p37 = scmp.ge.s32.totalorder %s36, 1
      %s38 = scalar_select %p37, 0, %s36
      %s39 = sadd.s32 1, %s23
      %s40 = scalar_select %p37, %s39, %s23
      %p41 = scmp.ge.s32.totalorder %s40, 2
      %s42 = scalar_select %p41, 0, %s40
      %s43 = ssub.s32 %s23, %s42
      %s44 = ssub.s32 %s24, %s38
      %s45 = sor.u32 %s43, %s44
      %p46 = scmp.eq.s32.totalorder %s45, 0
      %s48 = sadd.s32 %s47, 1
      %s49 = scalar_select %p46, %s47, %s48
      %p52 = pneg %p46
      %p53 = scmp.eq.s32.totalorder %s16, 7
      %p54 = por %p52, %p53
      %p55 = scmp.ne.s32.totalorder %s47, %s50
      %p56 = scmp.eq.s32.totalorder %s16, 0
      %p57 = por %p55, %p56
      %p58 = scmp.ne.s32.totalorder %s47, %s50
      %p59 = scmp.eq.s32.totalorder %s21, 7
      %p60 = por %p58, %p59
      %p61 = scmp.ne.s32.totalorder %s50, %s51
      %p62 = scmp.eq.s32.totalorder %s21, 0
      %p63 = por %p61, %p62
      %p64 = scmp.ne.s32.totalorder %s50, %s51
      %p65 = scmp.eq.s32.totalorder %s22, 7
      %p66 = por %p64, %p65
      %p68 = scmp.ne.s32.totalorder %s51, %s67
      %p69 = scmp.eq.s32.totalorder %s22, 0
      %p70 = por %p68, %p69
      %s71 = ssub.s32 %s23, %s42
      %p72 = scmp.eq.s32.totalorder %s71, 0
      %s74 = sadd.s32 %s73, 1
      %s75 = scalar_select %p72, %s73, %s74
      %p78 = pneg %p72
      %p79 = scmp.eq.s32.totalorder %s16, 7
      %p80 = por %p78, %p79
      %p81 = scmp.ne.s32.totalorder %s73, %s76
      %p82 = scmp.eq.s32.totalorder %s16, 0
      %p83 = por %p81, %p82
      %p84 = scmp.ne.s32.totalorder %s73, %s76
      %p85 = scmp.eq.s32.totalorder %s21, 7
      %p86 = por %p84, %p85
      %p87 = scmp.ne.s32.totalorder %s76, %s77
      %p88 = scmp.eq.s32.totalorder %s21, 0
      %p89 = por %p87, %p88
      %p90 = scmp.ne.s32.totalorder %s76, %s77
      %p91 = scmp.eq.s32.totalorder %s22, 7
      %p92 = por %p90, %p91
      %p94 = scmp.ne.s32.totalorder %s77, %s93
      %p95 = scmp.eq.s32.totalorder %s22, 0
      %p96 = por %p94, %p95
      %s98 = sadd.s32 %s97, 1
      %p101 = scmp.eq.s32.totalorder %s16, 7
      %p102 = scmp.ne.s32.totalorder %s97, %s99
      %p103 = scmp.eq.s32.totalorder %s16, 0
      %p104 = por %p102, %p103
      %p105 = scmp.ne.s32.totalorder %s97, %s99
      %p106 = scmp.eq.s32.totalorder %s21, 7
      %p107 = por %p105, %p106
      %p108 = scmp.ne.s32.totalorder %s99, %s100
      %p109 = scmp.eq.s32.totalorder %s21, 0
      %p110 = por %p108, %p109
      %p111 = scmp.ne.s32.totalorder %s99, %s100
      %p112 = scmp.eq.s32.totalorder %s22, 7
      %p113 = por %p111, %p112
      %p115 = scmp.ne.s32.totalorder %s100, %s114
      %p116 = scmp.eq.s32.totalorder %s22, 0
      %p117 = por %p115, %p116
      %s119 = sadd.s32 %s118, 1
      %p122 = scmp.eq.s32.totalorder %s16, 7
      %p123 = scmp.ne.s32.totalorder %s118, %s120
      %p124 = scmp.eq.s32.totalorder %s16, 0
      %p125 = por %p123, %p124
      %p126 = scmp.ne.s32.totalorder %s118, %s120
      %p127 = scmp.eq.s32.totalorder %s21, 7
      %p128 = por %p126, %p127
      %p129 = scmp.ne.s32.totalorder %s120, %s121
      %p130 = scmp.eq.s32.totalorder %s21, 0
      %p131 = por %p129, %p130
      %p132 = scmp.ne.s32.totalorder %s120, %s121
      %p133 = scmp.eq.s32.totalorder %s22, 7
      %p134 = por %p132, %p133
      %p136 = scmp.ne.s32.totalorder %s121, %s135
      %p137 = scmp.eq.s32.totalorder %s22, 0
      %p138 = por %p136, %p137
      %s140 = sadd.s32 %s139, 1
      %p143 = scmp.eq.s32.totalorder %s16, 7
      %p144 = scmp.ne.s32.totalorder %s139, %s141
      %p145 = scmp.eq.s32.totalorder %s16, 0
      %p146 = por %p144, %p145
      %p147 = scmp.ne.s32.totalorder %s139, %s141
      %p148 = scmp.eq.s32.totalorder %s21, 7
      %p149 = por %p147, %p148
      %p150 = scmp.ne.s32.totalorder %s141, %s142
      %p151 = scmp.eq.s32.totalorder %s21, 0
      %p152 = por %p150, %p151
      %p153 = scmp.ne.s32.totalorder %s141, %s142
      %p154 = scmp.eq.s32.totalorder %s22, 7
      %p155 = por %p153, %p154
      %p157 = scmp.ne.s32.totalorder %s142, %s156
      %p158 = scmp.eq.s32.totalorder %s22, 0
      %p159 = por %p157, %p158
      %s161 = sadd.s32 %s160, 1
      %p164 = scmp.eq.s32.totalorder %s16, 7
      %p165 = scmp.ne.s32.totalorder %s160, %s162
      %p166 = scmp.eq.s32.totalorder %s16, 0
      %p167 = por %p165, %p166
      %p168 = scmp.ne.s32.totalorder %s160, %s162
      %p169 = scmp.eq.s32.totalorder %s21, 7
      %p170 = por %p168, %p169
      %p171 = scmp.ne.s32.totalorder %s162, %s163
      %p172 = scmp.eq.s32.totalorder %s21, 0
      %p173 = por %p171, %p172
      %p174 = scmp.ne.s32.totalorder %s162, %s163
      %p175 = scmp.eq.s32.totalorder %s22, 7
      %p176 = por %p174, %p175
      %p178 = scmp.ne.s32.totalorder %s163, %s177
      %p179 = scmp.eq.s32.totalorder %s22, 0
      %p180 = por %p178, %p179
      %s182 = sadd.s32 %s181, 1
      %p185 = scmp.eq.s32.totalorder %s16, 7
      %p186 = scmp.ne.s32.totalorder %s181, %s183
      %p187 = scmp.eq.s32.totalorder %s16, 0
      %p188 = por %p186, %p187
      %p189 = scmp.ne.s32.totalorder %s181, %s183
      %p190 = scmp.eq.s32.totalorder %s21, 7
      %p191 = por %p189, %p190
      %p192 = scmp.ne.s32.totalorder %s183, %s184
      %p193 = scmp.eq.s32.totalorder %s21, 0
      %p194 = por %p192, %p193
      %p195 = scmp.ne.s32.totalorder %s183, %s184
      %p196 = scmp.eq.s32.totalorder %s22, 7
      %p197 = por %p195, %p196
      %p199 = scmp.ne.s32.totalorder %s184, %s198
      %p200 = scmp.eq.s32.totalorder %s22, 0
      %p201 = por %p199, %p200
      %s202 = ssub.s32 %s23, %s42
      %s203 = ssub.s32 %s24, %s38
      %s204 = sor.u32 %s202, %s203
      %p205 = scmp.eq.s32.totalorder %s204, 0
      %s207 = sadd.s32 %s206, 1
      %s208 = scalar_select %p205, %s206, %s207
      %p211 = pneg %p205
      %p212 = scmp.eq.s32.totalorder %s16, 7
      %p213 = por %p211, %p212
      %p214 = scmp.ne.s32.totalorder %s206, %s209
      %p215 = scmp.eq.s32.totalorder %s16, 0
      %p216 = por %p214, %p215
      %p217 = scmp.ne.s32.totalorder %s206, %s209
      %p218 = scmp.eq.s32.totalorder %s21, 7
      %p219 = por %p217, %p218
      %p220 = scmp.ne.s32.totalorder %s209, %s210
      %p221 = scmp.eq.s32.totalorder %s21, 0
      %p222 = por %p220, %p221
      %p223 = scmp.ne.s32.totalorder %s209, %s210
      %p224 = scmp.eq.s32.totalorder %s22, 7
      %p225 = por %p223, %p224
      %p227 = scmp.ne.s32.totalorder %s210, %s226
      %p228 = scmp.eq.s32.totalorder %s22, 0
      %p229 = por %p227, %p228
      %p230 = scmp.le.s32.totalorder 1, %s16
      %p231 = scmp.lt.s32.totalorder %s16, 9
      %p232 = pnand %p230, %p231
      %p233 = pneg %p232
      // Predicated region
      $region9: #{tpu_custom_call.1} parent=5 // pred_check
        _
      $region10: #{tpu_custom_call.1} parent=5 // pred_check_branch
        %235 = sbr.rel (%p232) target = $region12
      $region11: #{tpu_custom_call.1} parent=5 // pred_region
        %s236 = ssub.s32 %s16, 1
        // Predicated region
        $region13: #{tpu_custom_call.1} parent=11 // pred_check
          %p237 = pneg %p110
        $region14: #{tpu_custom_call.1} parent=11 // pred_check_branch
          %239 = sbr.rel (%p237) target = $region16
        $region15: #{tpu_custom_call.1} parent=11 // pred_region
          _
        $region16: #{tpu_custom_call.1} parent=11 // pred_fallthru
          _
        // Predicated region
        $region17: #{tpu_custom_call.1} parent=11 // pred_check
          %p240 = pneg %p131
        $region18: #{tpu_custom_call.1} parent=11 // pred_check_branch
          %242 = sbr.rel (%p240) target = $region20
        $region19: #{tpu_custom_call.1} parent=11 // pred_region
          _
        $region20: #{tpu_custom_call.1} parent=11 // pred_fallthru
          _
        // Predicated region
        $region21: #{tpu_custom_call.1} parent=11 // pred_check
          %p243 = pneg %p152
        $region22: #{tpu_custom_call.1} parent=11 // pred_check_branch
          %245 = sbr.rel (%p243) target = $region24
        $region23: #{tpu_custom_call.1} parent=11 // pred_region
          _
        $region24: #{tpu_custom_call.1} parent=11 // pred_fallthru
          _
        // Predicated region
        $region25: #{tpu_custom_call.1} parent=11 // pred_check
          %p246 = pneg %p173
        $region26: #{tpu_custom_call.1} parent=11 // pred_check_branch
          %248 = sbr.rel (%p246) target = $region28
        $region27: #{tpu_custom_call.1} parent=11 // pred_region
          _
        $region28: #{tpu_custom_call.1} parent=11 // pred_fallthru
          _
        // Predicated region
        $region29: #{tpu_custom_call.1} parent=11 // pred_check
          %p249 = pneg %p194
        $region30: #{tpu_custom_call.1} parent=11 // pred_check_branch
          %251 = sbr.rel (%p249) target = $region32
        $region31: #{tpu_custom_call.1} parent=11 // pred_region
          _
        $region32: #{tpu_custom_call.1} parent=11 // pred_fallthru
          _
      $region12: #{tpu_custom_call.1} parent=5 // pred_fallthru
        _
      %p252 = scmp.lt.s32.totalorder %s16, 8
      // Predicated region
      $region33: #{tpu_custom_call.1} parent=5 // pred_check
        %p253 = pneg %p252
      $region34: #{tpu_custom_call.1} parent=5 // pred_check_branch
        %255 = sbr.rel (%p253) target = $region36
      $region35: #{tpu_custom_call.1} parent=5 // pred_region
        // Predicated region
        $region37: #{tpu_custom_call.1} parent=35 // pred_check
          %p256 = pneg %p57
        $region38: #{tpu_custom_call.1} parent=35 // pred_check_branch
          %258 = sbr.rel (%p256) target = $region40
        $region39: #{tpu_custom_call.1} parent=35 // pred_region
          %p259 = scmp.lt.s32.totalorder %s23, 1
          %s260 = scalar_select %p259, %s23, 1
          %p261 = scmp.lt.s32.totalorder %s24, 0
          %s262 = scalar_select %p261, %s24, 0
          %s263 = sadd.s32 %s262, %s260
          %s264 = smul.addr %s263, 8
          %s265 = scalar_lea.vmem %s0, %s264
        $region40: #{tpu_custom_call.1} parent=35 // pred_fallthru
          _
        // Predicated region
        $region41: #{tpu_custom_call.1} parent=35 // pred_check
          %p266 = pneg %p83
        $region42: #{tpu_custom_call.1} parent=35 // pred_check_branch
          %268 = sbr.rel (%p266) target = $region44
        $region43: #{tpu_custom_call.1} parent=35 // pred_region
          %p269 = scmp.lt.s32.totalorder %s23, 1
          %s270 = scalar_select %p269, %s23, 1
          %s271 = smul.addr %s270, 8
          %s272 = scalar_lea.vmem %s1, %s271
        $region44: #{tpu_custom_call.1} parent=35 // pred_fallthru
          _
      $region36: #{tpu_custom_call.1} parent=5 // pred_fallthru
        _
      %p273 = scmp.le.s32.totalorder 1, %s16
      %p274 = scmp.lt.s32.totalorder %s16, 9
      %p275 = pnand %p273, %p274
      %p276 = pneg %p275
      // Predicated region
      $region45: #{tpu_custom_call.1} parent=5 // pred_check
        _
      $region46: #{tpu_custom_call.1} parent=5 // pred_check_branch
        %278 = sbr.rel (%p275) target = $region48
      $region47: #{tpu_custom_call.1} parent=5 // pred_region
        %s279 = ssub.s32 %s16, 1
        %p280 = scmp.lt.s32.totalorder %s26, 1
        %s281 = scalar_select %p280, %s26, 1
        %p282 = scmp.lt.s32.totalorder %s27, 0
        %s283 = scalar_select %p282, %s27, 0
        %s284 = sadd.s32 %s283, %s281
        %s285 = smul.addr %s284, 8
        %s286 = scalar_lea.vmem %s0, %s285
        %p287 = pneg %p63
        %p288 = pneg %p60
        %p289 = scmp.lt.s32.totalorder %s26, 1
        %s290 = scalar_select %p289, %s26, 1
        %s291 = smul.addr %s290, 8
        %s292 = scalar_lea.vmem %s1, %s291
        %p293 = pneg %p89
        %p294 = pneg %p86
        %p295 = pneg %p110
        %p296 = pneg %p107
        %p297 = pneg %p131
        %p298 = pneg %p128
        %p299 = pneg %p152
        %p300 = pneg %p149
        %p301 = pneg %p173
        %p302 = pneg %p170
        %p303 = pneg %p194
        %p304 = pneg %p191
        %p305 = pneg %p222
        %p306 = pneg %p219
        %s307 = sand.u32 %s209, 1
        %s308 = scalar_lea.sflag [#allocation6], %s307
        %s309 = sand.u32 %s209, 1
        %s310 = smul.addr %s309, 8
        %s311 = scalar_lea.vmem [#allocation5], %s310
        %p312 = scmp.lt.s32.totalorder %s26, 1
        %s313 = scalar_select %p312, %s26, 1
        %p314 = scmp.lt.s32.totalorder %s27, 0
        %s315 = scalar_select %p314, %s27, 0
        %s316 = sadd.s32 %s315, %s313
        %s317 = smul.addr %s316, 8
        %s318 = scalar_lea.vmem %s0, %s317
        %p319 = scmp.lt.s32.totalorder %s26, 1
        %s320 = scalar_select %p319, %s26, 1
        %s321 = smul.addr %s320, 8
        %s322 = scalar_lea.vmem %s1, %s321
        %p323 = scmp.eq.s32.totalorder %s27, 0
        // Predicated region
        $region49: #{tpu_custom_call.1} parent=47 // pred_check
          %p324 = pneg %p323
        $region50: #{tpu_custom_call.1} parent=47 // pred_check_branch
          %326 = sbr.rel (%p324) target = $region52
        $region51: #{tpu_custom_call.1} parent=47 // pred_region
          %v327 = vld [vmem:[%s322] sm:$0xff]
          %s328 = smul.u32 %s28, 32
          %s329 = scalar_lea.vmem %s3, %s328
          %v330 = vld [vmem:[%s329] sm:$0xff]
          %v331 = vld [vmem:[%s329 + $0x8] sm:$0xff]
          %v332 = vld [vmem:[%s329 + $0x10] sm:$0xff]
          %v333 = vld [vmem:[%s329 + $0x18] sm:$0xff]
          %vm334 = vcmask 261120
          %v336 = vsel %vm334, %v327, 0
          %338 = vmatprep.subr.mxu0 0.0
          %339 = vmatpush1.msra.mxu0 %v330
          %340 = vmatprep.subr.mxu0 0.0
          %341 = vmatpush1.msra.mxu0 %v331
          %342 = vmatprep.subr.mxu0 0.0
          %343 = vmatpush1.msra.mxu0 %v332
          %344 = vmatprep.subr.mxu0 0.0
          %345 = vmatpush1.msra.mxu0 %v333
          %346 = vmatprep.subr.mxu0 0.0
          %347 = vmatpush1.msra.mxu0 0.0
          %348 = vmatprep.subr.mxu0 0.0
          %349 = vmatpush1.msra.mxu0 0.0
          %350 = vmatprep.subr.mxu0 0.0
          %351 = vmatpush1.msra.mxu0 0.0
          %352 = vmatprep.subr.mxu0 0.0
          %353 = vmatpush1.msra.mxu0 0.0
          %354 = vmatprep.subr.mxu0 0.0
          %355 = vmatpush1.msra.mxu0 0.0
          %356 = vmatprep.subr.mxu0 0.0
          %357 = vmatpush1.msra.mxu0 0.0
          %358 = vmatprep.subr.mxu0 0.0
          %359 = vmatpush1.msra.mxu0 0.0
          %360 = vmatprep.subr.mxu0 0.0
          %361 = vmatpush1.msra.mxu0 0.0
          %362 = vmatprep.subr.mxu0 0.0
          %363 = vmatpush1.msra.mxu0 0.0
          %364 = vmatprep.subr.mxu0 0.0
          %365 = vmatpush1.msra.mxu0 0.0
          %366 = vmatprep.subr.mxu0 0.0
          %367 = vmatpush1.msra.mxu0 0.0
          %368 = vmatprep.subr.mxu0 0.0
          %369 = vmatpush1.msra.mxu0 0.0
          %370 = vmatprep.subr.mxu0 0.0
          %371 = vmatpush1.msra.mxu0 0.0
          %372 = vmatprep.subr.mxu0 0.0
          %373 = vmatpush1.msra.mxu0 0.0
          %374 = vmatprep.subr.mxu0 0.0
          %375 = vmatpush1.msra.mxu0 0.0
          %376 = vmatprep.subr.mxu0 0.0
          %377 = vmatpush1.msra.mxu0 0.0
          %378 = vmatprep.subr.mxu0 0.0
          %379 = vmatpush1.msra.mxu0 0.0
          %380 = vmatprep.subr.mxu0 0.0
          %381 = vmatpush1.msra.mxu0 0.0
          %382 = vmatprep.subr.mxu0 0.0
          %383 = vmatpush1.msra.mxu0 0.0
          %384 = vmatprep.subr.mxu0 0.0
          %385 = vmatpush1.msra.mxu0 0.0
          %386 = vmatprep.subr.mxu0 0.0
          %387 = vmatpush1.msra.mxu0 0.0
          %388 = vmatprep.subr.mxu0 0.0
          %389 = vmatpush1.msra.mxu0 0.0
          %390 = vmatprep.subr.mxu0 0.0
          %391 = vmatpush1.msra.mxu0 0.0
          %392 = vmatprep.subr.mxu0 0.0
          %393 = vmatpush1.msra.mxu0 0.0
          %394 = vmatprep.subr.mxu0 0.0
          %395 = vmatpush1.msra.mxu0 0.0
          %396 = vmatprep.subr.mxu0 0.0
          %397 = vmatpush1.msra.mxu0 0.0
          %398 = vmatprep.subr.mxu0 0.0
          %399 = vmatpush1.msra.mxu0 0.0
          %400 = vmatprep.subr.mxu0 0.0
          %401 = vmatpush1.msra.mxu0 0.0
          %402 = vmatprep.mubr.f32.mxu0 0.0
          %403 = vmatmul.mubr.f32.gmra.mrb[0].mxu0 %v336
          %v404 = vpop.f32.mrb[0].mxu0
          %v405 = vadd.f32 0.0, %v404
          %v406 = vpop.f32.mrb[0].mxu0
          %407 = vdwg.mxu0
          %s408 = smul.u32 %s28, 8
          %s409 = scalar_lea.vmem [#allocation2], %s408
          %vm410 = vcmask 64512
          %411 = vst.msk [vmem:[%s409] sm:$0xff] %vm410, %v405
          %s412 = scalar_lea.vmem %s4, %s328
          %v413 = vld [vmem:[%s412] sm:$0xff]
          %v414 = vld [vmem:[%s412 + $0x8] sm:$0xff]
          %v415 = vld [vmem:[%s412 + $0x10] sm:$0xff]
          %v416 = vld [vmem:[%s412 + $0x18] sm:$0xff]
          %417 = vmatprep.subr.mxu0 0.0
          %418 = vmatpush1.msra.mxu0 %v413
          %419 = vmatprep.subr.mxu0 0.0
          %420 = vmatpush1.msra.mxu0 %v414
          %421 = vmatprep.subr.mxu0 0.0
          %422 = vmatpush1.msra.mxu0 %v415
          %423 = vmatprep.subr.mxu0 0.0
          %424 = vmatpush1.msra.mxu0 %v416
          %425 = vmatprep.subr.mxu0 0.0
          %426 = vmatpush1.msra.mxu0 0.0
          %427 = vmatprep.subr.mxu0 0.0
          %428 = vmatpush1.msra.mxu0 0.0
          %429 = vmatprep.subr.mxu0 0.0
          %430 = vmatpush1.msra.mxu0 0.0
          %431 = vmatprep.subr.mxu0 0.0
          %432 = vmatpush1.msra.mxu0 0.0
          %433 = vmatprep.subr.mxu0 0.0
          %434 = vmatpush1.msra.mxu0 0.0
          %435 = vmatprep.subr.mxu0 0.0
          %436 = vmatpush1.msra.mxu0 0.0
          %437 = vmatprep.subr.mxu0 0.0
          %438 = vmatpush1.msra.mxu0 0.0
          %439 = vmatprep.subr.mxu0 0.0
          %440 = vmatpush1.msra.mxu0 0.0
          %441 = vmatprep.subr.mxu0 0.0
          %442 = vmatpush1.msra.mxu0 0.0
          %443 = vmatprep.subr.mxu0 0.0
          %444 = vmatpush1.msra.mxu0 0.0
          %445 = vmatprep.subr.mxu0 0.0
          %446 = vmatpush1.msra.mxu0 0.0
          %447 = vmatprep.subr.mxu0 0.0
          %448 = vmatpush1.msra.mxu0 0.0
          %449 = vmatprep.subr.mxu0 0.0
          %450 = vmatpush1.msra.mxu0 0.0
          %451 = vmatprep.subr.mxu0 0.0
          %452 = vmatpush1.msra.mxu0 0.0
          %453 = vmatprep.subr.mxu0 0.0
          %454 = vmatpush1.msra.mxu0 0.0
          %455 = vmatprep.subr.mxu0 0.0
          %456 = vmatpush1.msra.mxu0 0.0
          %457 = vmatprep.subr.mxu0 0.0
          %458 = vmatpush1.msra.mxu0 0.0
          %459 = vmatprep.subr.mxu0 0.0
          %460 = vmatpush1.msra.mxu0 0.0
          %461 = vmatprep.subr.mxu0 0.0
          %462 = vmatpush1.msra.mxu0 0.0
          %463 = vmatprep.subr.mxu0 0.0
          %464 = vmatpush1.msra.mxu0 0.0
          %465 = vmatprep.subr.mxu0 0.0
          %466 = vmatpush1.msra.mxu0 0.0
          %467 = vmatprep.subr.mxu0 0.0
          %468 = vmatpush1.msra.mxu0 0.0
          %469 = vmatprep.subr.mxu0 0.0
          %470 = vmatpush1.msra.mxu0 0.0
          %471 = vmatprep.subr.mxu0 0.0
          %472 = vmatpush1.msra.mxu0 0.0
          %473 = vmatprep.subr.mxu0 0.0
          %474 = vmatpush1.msra.mxu0 0.0
          %475 = vmatprep.subr.mxu0 0.0
          %476 = vmatpush1.msra.mxu0 0.0
          %477 = vmatprep.subr.mxu0 0.0
          %478 = vmatpush1.msra.mxu0 0.0
          %479 = vmatprep.subr.mxu0 0.0
          %480 = vmatpush1.msra.mxu0 0.0
          %481 = vmatprep.mubr.f32.mxu0 0.0
          %482 = vmatmul.mubr.f32.gmra.mrb[0].mxu0 %v336
          %v483 = vpop.f32.mrb[0].mxu0
          %v484 = vadd.f32 0.0, %v483
          %v485 = vpop.f32.mrb[0].mxu0
          %486 = vdwg.mxu0
          %s487 = scalar_lea.vmem [#allocation3], %s408
          %488 = vst.msk [vmem:[%s487] sm:$0xff] %vm410, %v484
        $region52: #{tpu_custom_call.1} parent=47 // pred_fallthru
          _
        %v489 = vld [vmem:[%s318] sm:$0xff]
        %s490 = smul.u32 %s28, 32
        %s491 = scalar_lea.vmem %s2, %s490
        %v492 = vld [vmem:[%s491] sm:$0xff]
        %v493 = vld [vmem:[%s491 + $0x8] sm:$0xff]
        %v494 = vld [vmem:[%s491 + $0x10] sm:$0xff]
        %v495 = vld [vmem:[%s491 + $0x18] sm:$0xff]
        %vm496 = vcmask 261120
        %v498 = vsel %vm496, %v489, 0
        %500 = vmatprep.subr.mxu0 0.0
        %501 = vmatpush1.msra.mxu0 %v492
        %502 = vmatprep.subr.mxu0 0.0
        %503 = vmatpush1.msra.mxu0 %v493
        %504 = vmatprep.subr.mxu0 0.0
        %505 = vmatpush1.msra.mxu0 %v494
        %506 = vmatprep.subr.mxu0 0.0
        %507 = vmatpush1.msra.mxu0 %v495
        %508 = vmatprep.subr.mxu0 0.0
        %509 = vmatpush1.msra.mxu0 0.0
        %510 = vmatprep.subr.mxu0 0.0
        %511 = vmatpush1.msra.mxu0 0.0
        %512 = vmatprep.subr.mxu0 0.0
        %513 = vmatpush1.msra.mxu0 0.0
        %514 = vmatprep.subr.mxu0 0.0
        %515 = vmatpush1.msra.mxu0 0.0
        %516 = vmatprep.subr.mxu0 0.0
        %517 = vmatpush1.msra.mxu0 0.0
        %518 = vmatprep.subr.mxu0 0.0
        %519 = vmatpush1.msra.mxu0 0.0
        %520 = vmatprep.subr.mxu0 0.0
        %521 = vmatpush1.msra.mxu0 0.0
        %522 = vmatprep.subr.mxu0 0.0
        %523 = vmatpush1.msra.mxu0 0.0
        %524 = vmatprep.subr.mxu0 0.0
        %525 = vmatpush1.msra.mxu0 0.0
        %526 = vmatprep.subr.mxu0 0.0
        %527 = vmatpush1.msra.mxu0 0.0
        %528 = vmatprep.subr.mxu0 0.0
        %529 = vmatpush1.msra.mxu0 0.0
        %530 = vmatprep.subr.mxu0 0.0
        %531 = vmatpush1.msra.mxu0 0.0
        %532 = vmatprep.subr.mxu0 0.0
        %533 = vmatpush1.msra.mxu0 0.0
        %534 = vmatprep.subr.mxu0 0.0
        %535 = vmatpush1.msra.mxu0 0.0
        %536 = vmatprep.subr.mxu0 0.0
        %537 = vmatpush1.msra.mxu0 0.0
        %538 = vmatprep.subr.mxu0 0.0
        %539 = vmatpush1.msra.mxu0 0.0
        %540 = vmatprep.subr.mxu0 0.0
        %541 = vmatpush1.msra.mxu0 0.0
        %542 = vmatprep.subr.mxu0 0.0
        %543 = vmatpush1.msra.mxu0 0.0
        %544 = vmatprep.subr.mxu0 0.0
        %545 = vmatpush1.msra.mxu0 0.0
        %546 = vmatprep.subr.mxu0 0.0
        %547 = vmatpush1.msra.mxu0 0.0
        %548 = vmatprep.subr.mxu0 0.0
        %549 = vmatpush1.msra.mxu0 0.0
        %550 = vmatprep.subr.mxu0 0.0
        %551 = vmatpush1.msra.mxu0 0.0
        %552 = vmatprep.subr.mxu0 0.0
        %553 = vmatpush1.msra.mxu0 0.0
        %554 = vmatprep.subr.mxu0 0.0
        %555 = vmatpush1.msra.mxu0 0.0
        %556 = vmatprep.subr.mxu0 0.0
        %557 = vmatpush1.msra.mxu0 0.0
        %558 = vmatprep.subr.mxu0 0.0
        %559 = vmatpush1.msra.mxu0 0.0
        %560 = vmatprep.subr.mxu0 0.0
        %561 = vmatpush1.msra.mxu0 0.0
        %562 = vmatprep.subr.mxu0 0.0
        %563 = vmatpush1.msra.mxu0 0.0
        %564 = vmatprep.mubr.f32.mxu0 0.0
        %565 = vmatmul.mubr.f32.gmra.mrb[0].mxu0 %v498
        %v566 = vpop.f32.mrb[0].mxu0
        %v567 = vadd.f32 0.0, %v566
        %v568 = vpop.f32.mrb[0].mxu0
        %569 = vdwg.mxu0
        %s570 = smul.u32 %s28, 8
        %s571 = scalar_lea.vmem [#allocation2], %s570
        %v572 = vld [vmem:[%s571] sm:$0xff]
        %s573 = scalar_lea.vmem [#allocation3], %s570
        %v574 = vld [vmem:[%s573] sm:$0xff]
        %vm575 = vcmask 64512
        %v577 = vsel %vm575, %v567, 0
        %v580 = vsel %vm575, %v572, 0
        %582 = vmatprep.subr.mxu0 0.0
        %583 = vmatpush1.xpose.msra.mxu0 %v580
        %584 = vmatprep.subr.mxu0 0.0
        %585 = vmatpush1.xpose.msra.mxu0 0.0
        %586 = vmatprep.subr.mxu0 0.0
        %587 = vmatpush1.xpose.msra.mxu0 0.0
        %588 = vmatprep.subr.mxu0 0.0
        %589 = vmatpush1.xpose.msra.mxu0 0.0
        %590 = vmatprep.subr.mxu0 0.0
        %591 = vmatpush1.xpose.msra.mxu0 0.0
        %592 = vmatprep.subr.mxu0 0.0
        %593 = vmatpush1.xpose.msra.mxu0 0.0
        %594 = vmatprep.subr.mxu0 0.0
        %595 = vmatpush1.xpose.msra.mxu0 0.0
        %596 = vmatprep.subr.mxu0 0.0
        %597 = vmatpush1.xpose.msra.mxu0 0.0
        %598 = vmatprep.subr.mxu0 0.0
        %599 = vmatpush1.xpose.msra.mxu0 0.0
        %600 = vmatprep.subr.mxu0 0.0
        %601 = vmatpush1.xpose.msra.mxu0 0.0
        %602 = vmatprep.subr.mxu0 0.0
        %603 = vmatpush1.xpose.msra.mxu0 0.0
        %604 = vmatprep.subr.mxu0 0.0
        %605 = vmatpush1.xpose.msra.mxu0 0.0
        %606 = vmatprep.subr.mxu0 0.0
        %607 = vmatpush1.xpose.msra.mxu0 0.0
        %608 = vmatprep.subr.mxu0 0.0
        %609 = vmatpush1.xpose.msra.mxu0 0.0
        %610 = vmatprep.subr.mxu0 0.0
        %611 = vmatpush1.xpose.msra.mxu0 0.0
        %612 = vmatprep.subr.mxu0 0.0
        %613 = vmatpush1.xpose.msra.mxu0 0.0
        %614 = vmatprep.subr.mxu0 0.0
        %615 = vmatpush1.xpose.msra.mxu0 0.0
        %616 = vmatprep.subr.mxu0 0.0
        %617 = vmatpush1.xpose.msra.mxu0 0.0
        %618 = vmatprep.subr.mxu0 0.0
        %619 = vmatpush1.xpose.msra.mxu0 0.0
        %620 = vmatprep.subr.mxu0 0.0
        %621 = vmatpush1.xpose.msra.mxu0 0.0
        %622 = vmatprep.subr.mxu0 0.0
        %623 = vmatpush1.xpose.msra.mxu0 0.0
        %624 = vmatprep.subr.mxu0 0.0
        %625 = vmatpush1.xpose.msra.mxu0 0.0
        %626 = vmatprep.subr.mxu0 0.0
        %627 = vmatpush1.xpose.msra.mxu0 0.0
        %628 = vmatprep.subr.mxu0 0.0
        %629 = vmatpush1.xpose.msra.mxu0 0.0
        %630 = vmatprep.subr.mxu0 0.0
        %631 = vmatpush1.xpose.msra.mxu0 0.0
        %632 = vmatprep.subr.mxu0 0.0
        %633 = vmatpush1.xpose.msra.mxu0 0.0
        %634 = vmatprep.subr.mxu0 0.0
        %635 = vmatpush1.xpose.msra.mxu0 0.0
        %636 = vmatprep.subr.mxu0 0.0
        %637 = vmatpush1.xpose.msra.mxu0 0.0
        %638 = vmatprep.subr.mxu0 0.0
        %639 = vmatpush1.xpose.msra.mxu0 0.0
        %640 = vmatprep.subr.mxu0 0.0
        %641 = vmatpush1.xpose.msra.mxu0 0.0
        %642 = vmatprep.subr.mxu0 0.0
        %643 = vmatpush1.xpose.msra.mxu0 0.0
        %644 = vmatprep.subr.mxu0 0.0
        %645 = vmatpush1.xpose.msra.mxu0 0.0
        %646 = vmatprep.mubr.f32.mxu0 0.0
        %647 = vmatmul.mubr.f32.gmra.mrb[0].mxu0 %v577
        %v648 = vpop.f32.mrb[0].mxu0
        %v649 = vadd.f32 0.0, %v648
        %v650 = vpop.f32.mrb[0].mxu0
        %651 = vdwg.mxu0
        %v652 = vsel %vm575, %v649, -inf
        %653 = vmax.xlane.f32.xlu0 %v652
        %v654 = vpop.xlane.xlu0 %653
        %v655 = vsub.f32 %v649, %v654
        %v656 = vmul.f32 %v655, 1.442695
        %v657 = vpow.pop %v656
        %v658 = vsel %vm575, %v657, 0.0
        %659 = vadd.xlane.f32.xlu0 %v658
        %v660 = vpop.xlane.xlu0 %659
        %v661 = vrcp.pop %v660
        %v662 = vmul.f32 %v657, %v661
        %v664 = vsel %vm575, %v662, 0
        %666 = vmatprep.subr.mxu0 0.0
        %667 = vmatpush1.msra.mxu0 %v574
        %668 = vmatprep.subr.mxu0 0.0
        %669 = vmatpush1.msra.mxu0 0.0
        %670 = vmatprep.subr.mxu0 0.0
        %671 = vmatpush1.msra.mxu0 0.0
        %672 = vmatprep.subr.mxu0 0.0
        %673 = vmatpush1.msra.mxu0 0.0
        %674 = vmatprep.subr.mxu0 0.0
        %675 = vmatpush1.msra.mxu0 0.0
        %676 = vmatprep.subr.mxu0 0.0
        %677 = vmatpush1.msra.mxu0 0.0
        %678 = vmatprep.subr.mxu0 0.0
        %679 = vmatpush1.msra.mxu0 0.0
        %680 = vmatprep.subr.mxu0 0.0
        %681 = vmatpush1.msra.mxu0 0.0
        %682 = vmatprep.subr.mxu0 0.0
        %683 = vmatpush1.msra.mxu0 0.0
        %684 = vmatprep.subr.mxu0 0.0
        %685 = vmatpush1.msra.mxu0 0.0
        %686 = vmatprep.subr.mxu0 0.0
        %687 = vmatpush1.msra.mxu0 0.0
        %688 = vmatprep.subr.mxu0 0.0
        %689 = vmatpush1.msra.mxu0 0.0
        %690 = vmatprep.subr.mxu0 0.0
        %691 = vmatpush1.msra.mxu0 0.0
        %692 = vmatprep.subr.mxu0 0.0
        %693 = vmatpush1.msra.mxu0 0.0
        %694 = vmatprep.subr.mxu0 0.0
        %695 = vmatpush1.msra.mxu0 0.0
        %696 = vmatprep.subr.mxu0 0.0
        %697 = vmatpush1.msra.mxu0 0.0
        %698 = vmatprep.subr.mxu0 0.0
        %699 = vmatpush1.msra.mxu0 0.0
        %700 = vmatprep.subr.mxu0 0.0
        %701 = vmatpush1.msra.mxu0 0.0
        %702 = vmatprep.subr.mxu0 0.0
        %703 = vmatpush1.msra.mxu0 0.0
        %704 = vmatprep.subr.mxu0 0.0
        %705 = vmatpush1.msra.mxu0 0.0
        %706 = vmatprep.subr.mxu0 0.0
        %707 = vmatpush1.msra.mxu0 0.0
        %708 = vmatprep.subr.mxu0 0.0
        %709 = vmatpush1.msra.mxu0 0.0
        %710 = vmatprep.subr.mxu0 0.0
        %711 = vmatpush1.msra.mxu0 0.0
        %712 = vmatprep.subr.mxu0 0.0
        %713 = vmatpush1.msra.mxu0 0.0
        %714 = vmatprep.subr.mxu0 0.0
        %715 = vmatpush1.msra.mxu0 0.0
        %716 = vmatprep.subr.mxu0 0.0
        %717 = vmatpush1.msra.mxu0 0.0
        %718 = vmatprep.subr.mxu0 0.0
        %719 = vmatpush1.msra.mxu0 0.0
        %720 = vmatprep.subr.mxu0 0.0
        %721 = vmatpush1.msra.mxu0 0.0
        %722 = vmatprep.subr.mxu0 0.0
        %723 = vmatpush1.msra.mxu0 0.0
        %724 = vmatprep.subr.mxu0 0.0
        %725 = vmatpush1.msra.mxu0 0.0
        %726 = vmatprep.subr.mxu0 0.0
        %727 = vmatpush1.msra.mxu0 0.0
        %728 = vmatprep.subr.mxu0 0.0
        %729 = vmatpush1.msra.mxu0 0.0
        %730 = vmatprep.mubr.f32.mxu0 0.0
        %731 = vmatmul.mubr.f32.gmra.mrb[0].mxu0 %v664
        %v732 = vpop.f32.mrb[0].mxu0
        %v733 = vadd.f32 0.0, %v732
        %v734 = vpop.f32.mrb[0].mxu0
        %735 = vdwg.mxu0
        %s736 = scalar_lea.vmem %s5, %s570
        %v737 = vld [vmem:[%s736] sm:$0xff]
        %v739 = vsel %vm575, %v733, 0
        %741 = vmatprep.subr.mxu0 0.0
        %742 = vmatpush1.msra.mxu0 %v737
        %743 = vmatprep.subr.mxu0 0.0
        %744 = vmatpush1.msra.mxu0 0.0
        %745 = vmatprep.subr.mxu0 0.0
        %746 = vmatpush1.msra.mxu0 0.0
        %747 = vmatprep.subr.mxu0 0.0
        %748 = vmatpush1.msra.mxu0 0.0
        %749 = vmatprep.subr.mxu0 0.0
        %750 = vmatpush1.msra.mxu0 0.0
        %751 = vmatprep.subr.mxu0 0.0
        %752 = vmatpush1.msra.mxu0 0.0
        %753 = vmatprep.subr.mxu0 0.0
        %754 = vmatpush1.msra.mxu0 0.0
        %755 = vmatprep.subr.mxu0 0.0
        %756 = vmatpush1.msra.mxu0 0.0
        %757 = vmatprep.subr.mxu0 0.0
        %758 = vmatpush1.msra.mxu0 0.0
        %759 = vmatprep.subr.mxu0 0.0
        %760 = vmatpush1.msra.mxu0 0.0
        %761 = vmatprep.subr.mxu0 0.0
        %762 = vmatpush1.msra.mxu0 0.0
        %763 = vmatprep.subr.mxu0 0.0
        %764 = vmatpush1.msra.mxu0 0.0
        %765 = vmatprep.subr.mxu0 0.0
        %766 = vmatpush1.msra.mxu0 0.0
        %767 = vmatprep.subr.mxu0 0.0
        %768 = vmatpush1.msra.mxu0 0.0
        %769 = vmatprep.subr.mxu0 0.0
        %770 = vmatpush1.msra.mxu0 0.0
        %771 = vmatprep.subr.mxu0 0.0
        %772 = vmatpush1.msra.mxu0 0.0
        %773 = vmatprep.subr.mxu0 0.0
        %774 = vmatpush1.msra.mxu0 0.0
        %775 = vmatprep.subr.mxu0 0.0
        %776 = vmatpush1.msra.mxu0 0.0
        %777 = vmatprep.subr.mxu0 0.0
        %778 = vmatpush1.msra.mxu0 0.0
        %779 = vmatprep.subr.mxu0 0.0
        %780 = vmatpush1.msra.mxu0 0.0
        %781 = vmatprep.subr.mxu0 0.0
        %782 = vmatpush1.msra.mxu0 0.0
        %783 = vmatprep.subr.mxu0 0.0
        %784 = vmatpush1.msra.mxu0 0.0
        %785 = vmatprep.subr.mxu0 0.0
        %786 = vmatpush1.msra.mxu0 0.0
        %787 = vmatprep.subr.mxu0 0.0
        %788 = vmatpush1.msra.mxu0 0.0
        %789 = vmatprep.subr.mxu0 0.0
        %790 = vmatpush1.msra.mxu0 0.0
        %791 = vmatprep.subr.mxu0 0.0
        %792 = vmatpush1.msra.mxu0 0.0
        %793 = vmatprep.subr.mxu0 0.0
        %794 = vmatpush1.msra.mxu0 0.0
        %795 = vmatprep.subr.mxu0 0.0
        %796 = vmatpush1.msra.mxu0 0.0
        %797 = vmatprep.subr.mxu0 0.0
        %798 = vmatpush1.msra.mxu0 0.0
        %799 = vmatprep.subr.mxu0 0.0
        %800 = vmatpush1.msra.mxu0 0.0
        %801 = vmatprep.subr.mxu0 0.0
        %802 = vmatpush1.msra.mxu0 0.0
        %803 = vmatprep.subr.mxu0 0.0
        %804 = vmatpush1.msra.mxu0 0.0
        %805 = vmatprep.mubr.f32.mxu0 0.0
        %806 = vmatmul.mubr.f32.gmra.mrb[0].mxu0 %v739
        %v807 = vpop.f32.mrb[0].mxu0
        %v808 = vadd.f32 0.0, %v807
        %v809 = vpop.f32.mrb[0].mxu0
        %810 = vdwg.mxu0
        %p811 = scmp.eq.s32.totalorder %s28, 0
        // Predicated region
        $region53: #{tpu_custom_call.1} parent=47 // pred_check
          %p812 = pneg %p811
        $region54: #{tpu_custom_call.1} parent=47 // pred_check_branch
          %814 = sbr.rel (%p812) target = $region56
        $region55: #{tpu_custom_call.1} parent=47 // pred_region
          %v815 = vld [vmem:[%s6] sm:$0x1]
          %v817 = vlaneseq
          %v818 = vshrl.u32 %v817, 7
          %v819 = vsub.s32 0, %v818
          %v820 = vrot.slane %v815, %v819
          %v822 = vadd.f32 %v808, %v820
          %823 = vst.msk [vmem:[#allocation4] sm:$0xff] %vm496, %v822
        $region56: #{tpu_custom_call.1} parent=47 // pred_fallthru
          _
        %p824 = scmp.ne.s32.totalorder %s28, 0
        // Predicated region
        $region57: #{tpu_custom_call.1} parent=47 // pred_check
          %p825 = pneg %p824
        $region58: #{tpu_custom_call.1} parent=47 // pred_check_branch
          %827 = sbr.rel (%p825) target = $region60
        $region59: #{tpu_custom_call.1} parent=47 // pred_region
          %v828 = vld [vmem:[#allocation4] sm:$0xff]
          %v829 = vadd.f32 %v828, %v808
          %830 = vst.msk [vmem:[#allocation4] sm:$0xff] %vm496, %v829
        $region60: #{tpu_custom_call.1} parent=47 // pred_fallthru
          _
        %p831 = scmp.eq.s32.totalorder %s28, 3
        // Predicated region
        $region61: #{tpu_custom_call.1} parent=47 // pred_check
          %p832 = pneg %p831
        $region62: #{tpu_custom_call.1} parent=47 // pred_check_branch
          %834 = sbr.rel (%p832) target = $region64
        $region63: #{tpu_custom_call.1} parent=47 // pred_region
          %v835 = vld [vmem:[#allocation4] sm:$0xff]
          %836 = vst.msk [vmem:[%s311] sm:$0xff] %vm496, %v835
        $region64: #{tpu_custom_call.1} parent=47 // pred_fallthru
          _
        %s837 = sand.u32 %s209, 1
        %s838 = scalar_lea.sflag [#allocation6], %s837
        %s839 = sand.u32 %s209, 1
        %s840 = smul.addr %s839, 8
        %s841 = scalar_lea.vmem [#allocation5], %s840
        // Predicated region
        $region65: #{tpu_custom_call.1} parent=47 // pred_check
          %p842 = pneg %p219
        $region66: #{tpu_custom_call.1} parent=47 // pred_check_branch
          %844 = sbr.rel (%p842) target = $region68
        $region67: #{tpu_custom_call.1} parent=47 // pred_region
          %s846 = ssub.s32 128, 128
          %847 = vsyncadd %s838, %s846
          %s848 = sadd.s32 %s27, %s26
          %s849 = smul.addr %s848, 128
          %s850 = scalar_lea.hbm %s7, %s849
          %s852 = sshll.u32 %s841, 4
          %s853 = int_to_ptr.vmem [resolvable:$true] %s852
          %855 = dma.vmem_to_hbm [thread:$0]  %s853, 128, %s850, %s838
        $region68: #{tpu_custom_call.1} parent=47 // pred_fallthru
          _
      $region48: #{tpu_custom_call.1} parent=5 // pred_fallthru
        _
      %p856 = scmp.le.s32.totalorder 2, %s16
      // Predicated region
      $region69: #{tpu_custom_call.1} parent=5 // pred_check
        %p857 = pneg %p856
      $region70: #{tpu_custom_call.1} parent=5 // pred_check_branch
        %859 = sbr.rel (%p857) target = $region72
      $region71: #{tpu_custom_call.1} parent=5 // pred_region
        %s860 = ssub.s32 %s16, 2
        // Predicated region
        $region73: #{tpu_custom_call.1} parent=71 // pred_check
          %p861 = pneg %p225
        $region74: #{tpu_custom_call.1} parent=71 // pred_check_branch
          %863 = sbr.rel (%p861) target = $region76
        $region75: #{tpu_custom_call.1} parent=71 // pred_region
          %s864 = sand.u32 %s210, 1
          %s865 = scalar_lea.sflag [#allocation6], %s864
          %s866 = sand.u32 %s210, 1
          %s867 = smul.addr %s866, 8
          %s868 = scalar_lea.vmem [#allocation5], %s867
          %869 = dma.done %s865, 128
        $region76: #{tpu_custom_call.1} parent=71 // pred_fallthru
          _
      $region72: #{tpu_custom_call.1} parent=5 // pred_fallthru
        _
    $region6: #{tpu_custom_call.1} parent=1 // loop_footer
      %s20 = sadd.s32 1, %s16
    $region7: #{tpu_custom_call.1} parent=1 // loop_footer_branch
      %15 = sbr.rel target = $region3
    $region8: #{tpu_custom_call.1} parent=1 // loop_exit
      _
    %870 = vsyncpa [#allocation6], 1
    %s871 = scalar_lea.sflag [#allocation6], 1
    %872 = vsyncpa %s871, 1

</llo_original>
